<compile_context>
chip_gen: v7x
topology: tpu7x:2x2x1
jax: 0.10.0
libtpu: 0.0.40
codegen_flags: <defaults>
</compile_context>

<pallas_src>
import jax
import jax.numpy as jnp
from jax.experimental import pallas as pl
from jax.experimental.pallas import tpu as pltpu


def _mask_kernel(w_ref, o_ref):
    # Scalar identity copy in SMEM: weight.mul(1) == weight.
    o_ref[0] = w_ref[0]


def mask_forward(x, weight):
    """Forward pass of Mask: returns weight.mul(1); x is ignored (as in PyTorch).

    NOTE: in production this whole call should be replaced by `return weight`
    (the op is a pure identity); the Pallas path below is the minimal-overhead
    scalar (SMEM-only) formulation.
    """
    del x  # PyTorch forward does not use x

    # Flatten (1,1,1,1) -> (1,): 1-D f32 in SMEM pads to only 4 bytes,
    # avoiding the 4 KiB (8,128) vreg padding a VMEM tile would incur.
    w_flat = weight.reshape((1,))

    out_flat = pl.pallas_call(
        _mask_kernel,
        out_shape=jax.ShapeDtypeStruct((1,), weight.dtype),
        in_specs=[pl.BlockSpec(memory_space=pltpu.SMEM)],
        out_specs=pl.BlockSpec(memory_space=pltpu.SMEM),
    )(w_flat)

    # Restore the PyTorch parameter shape (metadata-only reshape in XLA).
    return out_flat.reshape(weight.shape)


if __name__ == "__main__":
    key = jax.random.PRNGKey(0)
    k_w, k_x = jax.random.split(key)

    # Deterministic parameter init mirroring `self.weight.data.uniform_(-1, 1)`
    # on a (1, 1, 1, 1) tensor.
    weight = jax.random.uniform(
        k_w, (1, 1, 1, 1), dtype=jnp.float32, minval=-1.0, maxval=1.0
    )

    # Example input (unused by the forward pass, kept for interface parity).
    x = jax.random.normal(k_x, (2, 4, 16, 16), dtype=jnp.float32)

    out = mask_forward(x, weight)
    out = jax.block_until_ready(out)

    # Sanity check against the trivial reference (weight * 1 == weight).
    assert out.shape == (1, 1, 1, 1)
    assert out.dtype == weight.dtype
    assert jnp.allclose(out, weight)

    print("KERNEL_OK")
</pallas_src>

<mosaic_0001>
module attributes {stable_mosaic.version = 11 : i64} {
  func.func @_mask_kernel(%arg0: memref<1xf32, #tpu.memory_space<smem>>, %arg1: memref<1xf32, #tpu.memory_space<smem>>) attributes {dimension_semantics = [], scalar_prefetch = 0 : i64, scratch_operands = 0 : i64, tpu.core_type = #tpu.core_type<tc>} {
    %c0 = arith.constant 0 : index
    %0 = memref.load %arg0[%c0] : memref<1xf32, #tpu.memory_space<smem>>
    %c0_0 = arith.constant 0 : index
    %1 = memref.load %arg1[%c0_0] : memref<1xf32, #tpu.memory_space<smem>>
    memref.store %0, %arg1[%c0_0] : memref<1xf32, #tpu.memory_space<smem>>
    return
  }
}

</mosaic_0001>

<llo_original>
// kernel: tpu_custom_call.1
$region0: #{tpu_custom_call.1}
  #allocation0 [shape = 'u32[]', space=smem, size = 0x4, offset = 0x4, fixed_abs, tag = 'smem constant byte address 0x4 - core index']
  #allocation1 [shape = 'u32[144,128]{1,0:T(1,128)}', space=vmem, size = 0x12000, scoped, tag = 'internal scratch']
  #allocation2 [shape = 'f32[1]{0:T(128)S(6)}', space=smem, size = 0x200, scoped, tag = 'scoped memory for tpu_custom_call.1']
  %s0 = inlined_call_operand.<no memory space> [shape: f32[1], index: 0, kind: input, shape index: {}]
  %s1 = inlined_call_operand.hbm [shape: f32[1], index: 1, kind: output, shape index: {}]
  %s2 = sld [smem:[#allocation0]]
  $region14: #{tpu_custom_call.1} parent=0
    _
  %s4 = ssub.s32 1, %s2
  %s5 = scalar_select 0, %s4, %s2
  %6 = sst [smem:[#allocation2]] %s0
  $region1: #{tpu_custom_call.1} parent=0
    #allocation3 [shape = 'u8[512]{0}', space=smem, size = 0x200, scoped, tag = 'output window, operand 0, single buffered']
    #allocation4 [shape = 's32[1]{0}', space=sflag, size = 0x4, scoped, tag = 'scoped memory for tpu_custom_call.1']
    %7 = vsyncpa [#allocation4], 0
    // Predicated region
    $region2: #{tpu_custom_call.1} parent=1 // pred_check
      _
    $region3: #{tpu_custom_call.1} parent=1 // pred_check_branch
      %9 = sbr.rel (0) target = $region5
    $region4: #{tpu_custom_call.1} parent=1 // pred_region
      _
    $region5: #{tpu_custom_call.1} parent=1 // pred_fallthru
      _
    %s10 = sld [smem:[#allocation2]]
    %s11 = scalar_lea.smem [#allocation3], 0
    %12 = sst [smem:[%s11]] %s10
    // Predicated region
    $region6: #{tpu_custom_call.1} parent=1 // pred_check
      _
    $region7: #{tpu_custom_call.1} parent=1 // pred_check_branch
      %14 = sbr.rel (0) target = $region9
    $region8: #{tpu_custom_call.1} parent=1 // pred_region
      %s16 = ssub.s32 16, 16
      %17 = vsyncadd [#allocation4], %s16
      %20 = dma.smem_to_hbm [#allocation3], 16, %s1, [#allocation4]
    $region9: #{tpu_custom_call.1} parent=1 // pred_fallthru
      _
    // Predicated region
    $region10: #{tpu_custom_call.1} parent=1 // pred_check
      _
    $region11: #{tpu_custom_call.1} parent=1 // pred_check_branch
      %22 = sbr.rel (0) target = $region13
    $region12: #{tpu_custom_call.1} parent=1 // pred_region
      %23 = dma.done [#allocation4], 16
    $region13: #{tpu_custom_call.1} parent=1 // pred_fallthru
      _
    %24 = sfence
    %25 = vsyncpa [#allocation4], 1

</llo_original>
